<compile_context>
chip_gen: v5e
topology: v5e:2x2
jax: 0.10.0
libtpu: 0.0.40
codegen_flags: <defaults>
</compile_context>

<pallas_src>
import functools

import jax
import jax.numpy as jnp
from jax.experimental import pallas as pl
from jax.experimental.pallas import tpu as pltpu

H1, H2 = 16, 8  # expert_hidden_layers in the PyTorch module


def _mmoe_kernel(n_expert, n_task, expert_dim,
                 x_ref, wa_ref, ba_ref, w2_ref, b2_ref, w3_ref, b3_ref,
                 seg_ref, r_ref, s_ref, out_ref):
    """One batch tile of the fused Expert_Gate forward.

    x_ref  : [TB, F]
    wa_ref : [F, n_expert*H1 + n_task*n_expert]   fused expert-L1 + gate weights
    ba_ref : [1, n_expert*H1 + n_task*n_expert]   fused biases (f32)
    w2_ref : [n_expert*H1, n_expert*H2]           block-diagonal
    b2_ref : [1, n_expert*H2]
    w3_ref : [n_expert*H2, n_expert*E]            block-diagonal
    b3_ref : [1, n_expert*E]
    seg_ref: [n_task*n_expert, n_task*n_expert]   0/1 per-task segment-sum
    r_ref  : [n_task*n_expert, n_task*n_expert*E] 0/1 gate lane-expansion
    s_ref  : [n_task*n_expert*E, n_task*E]        0/1 per-(task,lane) reduction
    out_ref: [TB, n_task*E]                       lane-dense output slab

    NOTE: when B % TB != 0 the last grid step contains padded rows; all ops
    here are row-local, so padded rows never contaminate valid rows and their
    writes are dropped on writeback.  Do not add full-tile reductions.
    """
    E = expert_dim
    d_exp = n_expert * H1

    x = x_ref[...].astype(wa_ref.dtype)

    # ---- fused layer 1: every expert's first Linear + every gate Linear ----
    a = jnp.dot(x, wa_ref[...], preferred_element_type=jnp.float32) + ba_ref[...]
    h1 = jnp.maximum(a[:, :d_exp], 0.0)          # [TB, n_expert*H1]
    logits = a[:, d_exp:]                        # [TB, n_task*n_expert]

    # ---- fused layers 2 & 3 across experts (block-diagonal weights) ----
    h2 = jnp.dot(h1.astype(w2_ref.dtype), w2_ref[...],
                 preferred_element_type=jnp.float32) + b2_ref[...]
    h2 = jnp.maximum(h2, 0.0)                    # [TB, n_expert*H2]
    h3 = jnp.dot(h2.astype(w3_ref.dtype), w3_ref[...],
                 preferred_element_type=jnp.float32) + b3_ref[...]
    h3 = jnp.maximum(h3, 0.0)                    # [TB, n_expert*E]

    # ---- fused per-task softmax (no Python task loop) ----
    # Subtract the row-global max: softmax is shift-invariant per task group,
    # and all exp arguments are <= 0 so there is no overflow.
    m = jnp.max(logits, axis=1, keepdims=True)
    p = jnp.exp(logits - m)                                     # [TB, nt*ne]
    denom = jnp.dot(p.astype(seg_ref.dtype), seg_ref[...],
                    preferred_element_type=jnp.float32)         # [TB, nt*ne]
    g = p * pl.reciprocal(denom, approx=True)                   # [TB, nt*ne]

    # ---- fused expert mixture for all tasks ----
    # Expand each gate weight across its expert's E lanes, replicate h3 once
    # across tasks, elementwise-multiply, reduce per (task, lane) on the MXU.
    g_exp = jnp.dot(g.astype(r_ref.dtype), r_ref[...],
                    preferred_element_type=jnp.float32)         # [TB, nt*ne*E]
    h3_rep = jnp.tile(h3, (1, n_task))                          # [TB, nt*ne*E]
    mix = (g_exp * h3_rep).astype(s_ref.dtype)
    out = jnp.dot(mix, s_ref[...], preferred_element_type=jnp.float32)

    out_ref[...] = out.astype(out_ref.dtype)                    # one full store

    # TODO(synk): wandb.log of per-expert gate means is host-side logging only.
    # TODO(synk): nn.Dropout layers are identity (eval / inference mode).


def _block_diag(blocks):
    rows = sum(b.shape[0] for b in blocks)
    cols = sum(b.shape[1] for b in blocks)
    out = jnp.zeros((rows, cols), blocks[0].dtype)
    r0 = c0 = 0
    for b in blocks:
        out = out.at[r0:r0 + b.shape[0], c0:c0 + b.shape[1]].set(b)
        r0 += b.shape[0]
        c0 += b.shape[1]
    return out


@functools.partial(jax.jit,
                   static_argnames=("n_expert", "n_task", "block_b",
                                    "matmul_dtype", "min_grid_steps"))
def expert_gate_forward(x, params, *, n_expert, n_task, block_b=2048,
                        matmul_dtype=jnp.bfloat16, min_grid_steps=2):
    """Fused Expert_Gate forward.  Returns [n_task, B, E] (stacked task outs)."""
    (w1, b1, w2, b2, w3, b3, wg, bg) = params
    B, F = x.shape
    E = w3.shape[-1]

    # ---- wrapper-side weight fusion (folded under jit) ----
    wa = jnp.concatenate(
        [w1.transpose(1, 0, 2).reshape(F, n_expert * H1),
         wg.transpose(1, 0, 2).reshape(F, n_task * n_expert)], axis=1)
    ba = jnp.concatenate(
        [b1.reshape(1, n_expert * H1), bg.reshape(1, n_task * n_expert)], axis=1)
    w2bd = _block_diag([w2[e] for e in range(n_expert)])   # [ne*H1, ne*H2]
    b2c = b2.reshape(1, n_expert * H2)
    w3bd = _block_diag([w3[e] for e in range(n_expert)])   # [ne*H2, ne*E]
    b3c = b3.reshape(1, n_expert * E)

    # 0/1 constant matrices for the fused gate/mixer pass.
    seg_mat = jnp.kron(jnp.eye(n_task, dtype=jnp.float32),
                       jnp.ones((n_expert, n_expert), jnp.float32))
    r_mat = jnp.kron(jnp.eye(n_task * n_expert, dtype=jnp.float32),
                     jnp.ones((1, E), jnp.float32))
    s_mat = jnp.kron(jnp.eye(n_task, dtype=jnp.float32),
                     jnp.tile(jnp.eye(E, dtype=jnp.float32), (n_expert, 1)))

    wa = wa.astype(matmul_dtype)
    w2bd = w2bd.astype(matmul_dtype)
    w3bd = w3bd.astype(matmul_dtype)
    seg_mat = seg_mat.astype(matmul_dtype)
    r_mat = r_mat.astype(matmul_dtype)
    s_mat = s_mat.astype(matmul_dtype)

    d1 = n_expert * H1 + n_task * n_expert

    # ---- batch-tile size: as large as possible, multiple of 8, and (when B
    # permits) capped so the grid has >= min_grid_steps steps so v7x's two
    # TensorCores both get work (negligible cost on 1-TC v5e/v6e). ----
    tb = min(block_b, B)
    if min_grid_steps > 1 and B > 8:
        cap = max(8, (-(-B // min_grid_steps) + 7) // 8 * 8)
        tb = min(tb, cap)
    if tb != B:
        tb = max(8, (tb // 8) * 8)
    grid = (pl.cdiv(B, tb),)

    def resident(shape):
        nd = len(shape)
        return pl.BlockSpec(shape, lambda i, _nd=nd: (0,) * _nd)

    inputs = (x, wa, ba, w2bd, b2c, w3bd, b3c, seg_mat, r_mat, s_mat)

    # Raise scoped VMEM only if a very large block_b would need it
    # (v7x physical ceiling is 64 MiB).
    resident_bytes = sum(a.size * a.dtype.itemsize for a in inputs[1:])
    per_step_bytes = 2 * tb * F * 4 + 2 * tb * n_task * E * 4
    vmem_limit = None
    if resident_bytes + per_step_bytes > (24 << 20):
        vmem_limit = min(int((resident_bytes + per_step_bytes) * 5 // 4),
                         60 << 20)

    flops = (2 * B * F * d1
             + 2 * B * (n_expert * H1) * (n_expert * H2)
             + 2 * B * (n_expert * H2) * (n_expert * E)
             + 2 * B * (n_task * n_expert) * (n_task * n_expert)
             + 2 * B * (n_task * n_expert) * (n_task * n_expert * E)
             + 2 * B * (n_task * n_expert * E) * (n_task * E))
    bytes_accessed = (sum(a.size * a.dtype.itemsize for a in inputs)
                      + 4 * B * n_task * E)

    kernel = functools.partial(_mmoe_kernel, n_expert, n_task, E)

    out2d = pl.pallas_call(
        kernel,
        grid=grid,
        in_specs=[
            pl.BlockSpec((tb, F), lambda i: (i, 0)),   # x: batch-tiled
            resident(wa.shape),
            resident(ba.shape),
            resident(w2bd.shape),
            resident(b2c.shape),
            resident(w3bd.shape),
            resident(b3c.shape),
            resident(seg_mat.shape),
            resident(r_mat.shape),
            resident(s_mat.shape),
        ],
        out_specs=pl.BlockSpec((tb, n_task * E), lambda i: (i, 0)),
        out_shape=jax.ShapeDtypeStruct((B, n_task * E), jnp.float32),
        compiler_params=pltpu.CompilerParams(
            dimension_semantics=("parallel",),
            vmem_limit_bytes=vmem_limit),
        cost_estimate=pl.CostEstimate(
            flops=flops,
            transcendentals=B * n_task * n_expert,
            bytes_accessed=bytes_accessed),
    )(*inputs)

    # Lane-dense slab [B, n_task*E] -> [n_task, B, E] (matches PyTorch list-of-[B,E]).
    return out2d.reshape(B, n_task, E).transpose(1, 0, 2)


def init_params(key, feature_dim, expert_dim, n_expert, n_task):
    """Deterministic synthetic parameters matching the PyTorch module shapes."""
    ks = jax.random.split(key, 8)
    scale = 0.1
    w1 = scale * jax.random.normal(ks[0], (n_expert, feature_dim, H1), jnp.float32)
    b1 = scale * jax.random.normal(ks[1], (n_expert, 1, H1), jnp.float32)
    w2 = scale * jax.random.normal(ks[2], (n_expert, H1, H2), jnp.float32)
    b2 = scale * jax.random.normal(ks[3], (n_expert, 1, H2), jnp.float32)
    w3 = scale * jax.random.normal(ks[4], (n_expert, H2, expert_dim), jnp.float32)
    b3 = scale * jax.random.normal(ks[5], (n_expert, 1, expert_dim), jnp.float32)
    wg = scale * jax.random.normal(ks[6], (n_task, feature_dim, n_expert), jnp.float32)
    bg = scale * jax.random.normal(ks[7], (n_task, 1, n_expert), jnp.float32)
    return (w1, b1, w2, b2, w3, b3, wg, bg)


def reference_forward(x, params, *, n_expert, n_task):
    """Pure-JAX reference matching the PyTorch module (eval mode)."""
    (w1, b1, w2, b2, w3, b3, wg, bg) = params
    e_outs = []
    for e in range(n_expert):
        h = jnp.maximum(x @ w1[e] + b1[e], 0.0)
        h = jnp.maximum(h @ w2[e] + b2[e], 0.0)
        h = jnp.maximum(h @ w3[e] + b3[e], 0.0)
        e_outs.append(h)
    e_stack = jnp.stack(e_outs, axis=1)  # [B, n_expert, E]
    outs = []
    for t in range(n_task):
        logits = x @ wg[t] + bg[t]
        g = jax.nn.softmax(logits, axis=1)
        outs.append(jnp.einsum("bne,bn->be", e_stack, g))
    return jnp.stack(outs, axis=0)  # [n_task, B, E]


if __name__ == "__main__":
    # Small shapes consistent with the module; B chosen so the grid has >= 2
    # steps and the last tile is partial (exercises both batch tiling paths).
    B, feature_dim, expert_dim = 100, 32, 8
    n_expert, n_task = 3, 2

    key = jax.random.PRNGKey(0)
    kx, kp = jax.random.split(key)
    x = jax.random.normal(kx, (B, feature_dim), jnp.float32)
    params = init_params(kp, feature_dim, expert_dim, n_expert, n_task)

    ref = reference_forward(x, params, n_expert=n_expert, n_task=n_task)

    # f32 MXU-input path (only error source: approx reciprocal in the softmax).
    out = expert_gate_forward(x, params, n_expert=n_expert, n_task=n_task,
                              matmul_dtype=jnp.float32)
    out = jax.block_until_ready(out)
    assert out.shape == (n_task, B, expert_dim)
    assert jnp.allclose(out, ref, atol=2e-3, rtol=2e-3), \
        float(jnp.max(jnp.abs(out - ref)))

    # Default bf16 MXU-input path (recommended on v5e/v6e/v7x), f32 accumulation.
    out_bf16 = expert_gate_forward(x, params, n_expert=n_expert, n_task=n_task)
    out_bf16 = jax.block_until_ready(out_bf16)
    assert out_bf16.shape == (n_task, B, expert_dim)
    assert jnp.allclose(out_bf16, ref, atol=4e-2, rtol=4e-2), \
        float(jnp.max(jnp.abs(out_bf16 - ref)))

    print("KERNEL_OK")
</pallas_src>

<mosaic_0001>
module attributes {stable_mosaic.version = 11 : i64} {
  func.func @_mmoe_kernel(%arg0: i32, %arg1: memref<56x32xf32, #tpu.memory_space<vmem>>, %arg2: memref<32x54xf32, #tpu.memory_space<vmem>>, %arg3: memref<1x54xf32, #tpu.memory_space<vmem>>, %arg4: memref<48x24xf32, #tpu.memory_space<vmem>>, %arg5: memref<1x24xf32, #tpu.memory_space<vmem>>, %arg6: memref<24x24xf32, #tpu.memory_space<vmem>>, %arg7: memref<1x24xf32, #tpu.memory_space<vmem>>, %arg8: memref<6x6xf32, #tpu.memory_space<vmem>>, %arg9: memref<6x48xf32, #tpu.memory_space<vmem>>, %arg10: memref<48x16xf32, #tpu.memory_space<vmem>>, %arg11: memref<56x16xf32, #tpu.memory_space<vmem>>) attributes {dimension_semantics = [#tpu.dimension_semantics<parallel>], iteration_bounds = array<i64: 2>, scalar_prefetch = 0 : i64, scratch_operands = 0 : i64, tpu.core_type = #tpu.core_type<tc>, window_params = [{transform_indices = @transform_0, window_bounds = array<i64: 56, 32>}, {pipeline_mode = #tpu.pipeline_mode<synchronous>, transform_indices = @transform_1, window_bounds = array<i64: 32, 54>}, {pipeline_mode = #tpu.pipeline_mode<synchronous>, transform_indices = @transform_2, window_bounds = array<i64: 1, 54>}, {pipeline_mode = #tpu.pipeline_mode<synchronous>, transform_indices = @transform_3, window_bounds = array<i64: 48, 24>}, {pipeline_mode = #tpu.pipeline_mode<synchronous>, transform_indices = @transform_4, window_bounds = array<i64: 1, 24>}, {pipeline_mode = #tpu.pipeline_mode<synchronous>, transform_indices = @transform_5, window_bounds = array<i64: 24, 24>}, {pipeline_mode = #tpu.pipeline_mode<synchronous>, transform_indices = @transform_6, window_bounds = array<i64: 1, 24>}, {pipeline_mode = #tpu.pipeline_mode<synchronous>, transform_indices = @transform_7, window_bounds = array<i64: 6, 6>}, {pipeline_mode = #tpu.pipeline_mode<synchronous>, transform_indices = @transform_8, window_bounds = array<i64: 6, 48>}, {pipeline_mode = #tpu.pipeline_mode<synchronous>, transform_indices = @transform_9, window_bounds = array<i64: 48, 16>}, {transform_indices = @transform_10, window_bounds = array<i64: 56, 16>}]} {
    %c0 = arith.constant 0 : index
    %c0_0 = arith.constant 0 : index
    %0 = vector.load %arg1[%c0, %c0_0] : memref<56x32xf32, #tpu.memory_space<vmem>>, vector<56x32xf32>
    %c0_1 = arith.constant 0 : index
    %c0_2 = arith.constant 0 : index
    %1 = vector.load %arg2[%c0_1, %c0_2] : memref<32x54xf32, #tpu.memory_space<vmem>>, vector<32x54xf32>
    %cst = arith.constant dense<0.000000e+00> : vector<56x54xf32>
    %2 = tpu.matmul %0, %1, %cst {dimension_numbers = #tpu.dot_dimension_numbers<[1], [0], [0], [1], [0, 0, 1, 1], [], []>} : vector<56x32xf32>, vector<32x54xf32>, vector<56x54xf32> -> vector<56x54xf32>
    %c0_3 = arith.constant 0 : index
    %c0_4 = arith.constant 0 : index
    %3 = vector.load %arg3[%c0_3, %c0_4] : memref<1x54xf32, #tpu.memory_space<vmem>>, vector<1x54xf32>
    %4 = vector.broadcast %3 : vector<1x54xf32> to vector<56x54xf32>
    %5 = arith.addf %2, %4 : vector<56x54xf32>
    %6 = vector.extract_strided_slice %5 {offsets = [0, 0], sizes = [56, 48], strides = [1, 1]} : vector<56x54xf32> to vector<56x48xf32>
    %cst_5 = arith.constant 0.000000e+00 : f32
    %7 = vector.broadcast %cst_5 : f32 to vector<56x48xf32>
    %8 = arith.maximumf %6, %7 : vector<56x48xf32>
    %9 = vector.extract_strided_slice %5 {offsets = [0, 48], sizes = [56, 6], strides = [1, 1]} : vector<56x54xf32> to vector<56x6xf32>
    %c0_6 = arith.constant 0 : index
    %c0_7 = arith.constant 0 : index
    %10 = vector.load %arg4[%c0_6, %c0_7] : memref<48x24xf32, #tpu.memory_space<vmem>>, vector<48x24xf32>
    %cst_8 = arith.constant dense<0.000000e+00> : vector<56x24xf32>
    %11 = tpu.matmul %8, %10, %cst_8 {dimension_numbers = #tpu.dot_dimension_numbers<[1], [0], [0], [1], [0, 0, 1, 1], [], []>} : vector<56x48xf32>, vector<48x24xf32>, vector<56x24xf32> -> vector<56x24xf32>
    %c0_9 = arith.constant 0 : index
    %c0_10 = arith.constant 0 : index
    %12 = vector.load %arg5[%c0_9, %c0_10] : memref<1x24xf32, #tpu.memory_space<vmem>>, vector<1x24xf32>
    %13 = vector.broadcast %12 : vector<1x24xf32> to vector<56x24xf32>
    %14 = arith.addf %11, %13 : vector<56x24xf32>
    %cst_11 = arith.constant 0.000000e+00 : f32
    %15 = vector.broadcast %cst_11 : f32 to vector<56x24xf32>
    %16 = arith.maximumf %14, %15 : vector<56x24xf32>
    %c0_12 = arith.constant 0 : index
    %c0_13 = arith.constant 0 : index
    %17 = vector.load %arg6[%c0_12, %c0_13] : memref<24x24xf32, #tpu.memory_space<vmem>>, vector<24x24xf32>
    %cst_14 = arith.constant dense<0.000000e+00> : vector<56x24xf32>
    %18 = tpu.matmul %16, %17, %cst_14 {dimension_numbers = #tpu.dot_dimension_numbers<[1], [0], [0], [1], [0, 0, 1, 1], [], []>} : vector<56x24xf32>, vector<24x24xf32>, vector<56x24xf32> -> vector<56x24xf32>
    %c0_15 = arith.constant 0 : index
    %c0_16 = arith.constant 0 : index
    %19 = vector.load %arg7[%c0_15, %c0_16] : memref<1x24xf32, #tpu.memory_space<vmem>>, vector<1x24xf32>
    %20 = vector.broadcast %19 : vector<1x24xf32> to vector<56x24xf32>
    %21 = arith.addf %18, %20 : vector<56x24xf32>
    %cst_17 = arith.constant 0.000000e+00 : f32
    %22 = vector.broadcast %cst_17 : f32 to vector<56x24xf32>
    %23 = arith.maximumf %21, %22 : vector<56x24xf32>
    %cst_18 = arith.constant dense<0xFF800000> : vector<56xf32>
    %24 = vector.multi_reduction <maximumf>, %9, %cst_18 [1] : vector<56x6xf32> to vector<56xf32>
    %25 = vector.shape_cast %24 : vector<56xf32> to vector<56x1xf32>
    %26 = vector.broadcast %25 : vector<56x1xf32> to vector<56x6xf32>
    %27 = arith.subf %9, %26 : vector<56x6xf32>
    %28 = math.exp %27 : vector<56x6xf32>
    %c0_19 = arith.constant 0 : index
    %c0_20 = arith.constant 0 : index
    %29 = vector.load %arg8[%c0_19, %c0_20] : memref<6x6xf32, #tpu.memory_space<vmem>>, vector<6x6xf32>
    %cst_21 = arith.constant dense<0.000000e+00> : vector<56x6xf32>
    %30 = tpu.matmul %28, %29, %cst_21 {dimension_numbers = #tpu.dot_dimension_numbers<[1], [0], [0], [1], [0, 0, 1, 1], [], []>} : vector<56x6xf32>, vector<6x6xf32>, vector<56x6xf32> -> vector<56x6xf32>
    %31 = tpu.reciprocal %30 {approx = true} : vector<56x6xf32> -> vector<56x6xf32>
    %32 = arith.mulf %28, %31 : vector<56x6xf32>
    %c0_22 = arith.constant 0 : index
    %c0_23 = arith.constant 0 : index
    %33 = vector.load %arg9[%c0_22, %c0_23] : memref<6x48xf32, #tpu.memory_space<vmem>>, vector<6x48xf32>
    %cst_24 = arith.constant dense<0.000000e+00> : vector<56x48xf32>
    %34 = tpu.matmul %32, %33, %cst_24 {dimension_numbers = #tpu.dot_dimension_numbers<[1], [0], [0], [1], [0, 0, 1, 1], [], []>} : vector<56x6xf32>, vector<6x48xf32>, vector<56x48xf32> -> vector<56x48xf32>
    %35 = tpu.concatenate %23, %23 in 1 : vector<56x24xf32>, vector<56x24xf32> -> vector<56x48xf32>
    %36 = arith.mulf %34, %35 : vector<56x48xf32>
    %c0_25 = arith.constant 0 : index
    %c0_26 = arith.constant 0 : index
    %37 = vector.load %arg10[%c0_25, %c0_26] : memref<48x16xf32, #tpu.memory_space<vmem>>, vector<48x16xf32>
    %cst_27 = arith.constant dense<0.000000e+00> : vector<56x16xf32>
    %38 = tpu.matmul %36, %37, %cst_27 {dimension_numbers = #tpu.dot_dimension_numbers<[1], [0], [0], [1], [0, 0, 1, 1], [], []>} : vector<56x48xf32>, vector<48x16xf32>, vector<56x16xf32> -> vector<56x16xf32>
    %c0_28 = arith.constant 0 : index
    %c0_29 = arith.constant 0 : index
    %39 = vector.load %arg11[%c0_28, %c0_29] : memref<56x16xf32, #tpu.memory_space<vmem>>, vector<56x16xf32>
    tpu.vector_store %arg11[%c0_28, %c0_29], %38 {strides = array<i32>} : memref<56x16xf32, #tpu.memory_space<vmem>>, vector<56x16xf32>,
    return
  }
  func.func @transform_0(%arg0: i32) -> (i32, i32) {
    %c0_i32 = arith.constant 0 : i32
    %c0_i32_0 = arith.constant 0 : i32
    return %arg0, %c0_i32 : i32, i32
  }
  func.func @transform_1(%arg0: i32) -> (i32, i32) {
    %c0_i32 = arith.constant 0 : i32
    %c0_i32_0 = arith.constant 0 : i32
    %c0_i32_1 = arith.constant 0 : i32
    return %c0_i32, %c0_i32_0 : i32, i32
  }
  func.func @transform_2(%arg0: i32) -> (i32, i32) {
    %c0_i32 = arith.constant 0 : i32
    %c0_i32_0 = arith.constant 0 : i32
    %c0_i32_1 = arith.constant 0 : i32
    return %c0_i32, %c0_i32_0 : i32, i32
  }
  func.func @transform_3(%arg0: i32) -> (i32, i32) {
    %c0_i32 = arith.constant 0 : i32
    %c0_i32_0 = arith.constant 0 : i32
    %c0_i32_1 = arith.constant 0 : i32
    return %c0_i32, %c0_i32_0 : i32, i32
  }
  func.func @transform_4(%arg0: i32) -> (i32, i32) {
    %c0_i32 = arith.constant 0 : i32
    %c0_i32_0 = arith.constant 0 : i32
    %c0_i32_1 = arith.constant 0 : i32
    return %c0_i32, %c0_i32_0 : i32, i32
  }
  func.func @transform_5(%arg0: i32) -> (i32, i32) {
    %c0_i32 = arith.constant 0 : i32
    %c0_i32_0 = arith.constant 0 : i32
    %c0_i32_1 = arith.constant 0 : i32
    return %c0_i32, %c0_i32_0 : i32, i32
  }
  func.func @transform_6(%arg0: i32) -> (i32, i32) {
    %c0_i32 = arith.constant 0 : i32
    %c0_i32_0 = arith.constant 0 : i32
    %c0_i32_1 = arith.constant 0 : i32
    return %c0_i32, %c0_i32_0 : i32, i32
  }
  func.func @transform_7(%arg0: i32) -> (i32, i32) {
    %c0_i32 = arith.constant 0 : i32
    %c0_i32_0 = arith.constant 0 : i32
    %c0_i32_1 = arith.constant 0 : i32
    return %c0_i32, %c0_i32_0 : i32, i32
  }
  func.func @transform_8(%arg0: i32) -> (i32, i32) {
    %c0_i32 = arith.constant 0 : i32
    %c0_i32_0 = arith.constant 0 : i32
    %c0_i32_1 = arith.constant 0 : i32
    return %c0_i32, %c0_i32_0 : i32, i32
  }
  func.func @transform_9(%arg0: i32) -> (i32, i32) {
    %c0_i32 = arith.constant 0 : i32
    %c0_i32_0 = arith.constant 0 : i32
    %c0_i32_1 = arith.constant 0 : i32
    return %c0_i32, %c0_i32_0 : i32, i32
  }
  func.func @transform_10(%arg0: i32) -> (i32, i32) {
    %c0_i32 = arith.constant 0 : i32
    %c0_i32_0 = arith.constant 0 : i32
    return %arg0, %c0_i32 : i32, i32
  }
}

</mosaic_0001>

<llo_original>
// kernel: expert_gate_forward.1
$region0: #{expert_gate_forward.1}
  #allocation0 [shape = 'u32[]', space=smem, size = 0x4, offset = 0x4, fixed_abs, tag = 'smem constant byte address 0x4 - core index']
  #allocation1 [shape = 'u32[72,128]{1,0:T(1,128)}', space=vmem, size = 0x9000, scoped, tag = 'internal scratch']
  %s0 = inlined_call_operand.vmem [shape: f32[100,32], index: 0, kind: input, shape index: {}]
  %s1 = inlined_call_operand.vmem [shape: f32[32,54], index: 1, kind: input, shape index: {}]
  %s2 = inlined_call_operand.vmem [shape: f32[1,54], index: 2, kind: input, shape index: {}]
  %s3 = inlined_call_operand.vmem [shape: f32[48,24], index: 3, kind: input, shape index: {}]
  %s4 = inlined_call_operand.vmem [shape: f32[1,24], index: 4, kind: input, shape index: {}]
  %s5 = inlined_call_operand.vmem [shape: f32[24,24], index: 5, kind: input, shape index: {}]
  %s6 = inlined_call_operand.vmem [shape: f32[1,24], index: 6, kind: input, shape index: {}]
  %s7 = inlined_call_operand.vmem [shape: f32[6,6], index: 7, kind: input, shape index: {}]
  %s8 = inlined_call_operand.vmem [shape: f32[6,48], index: 8, kind: input, shape index: {}]
  %s9 = inlined_call_operand.vmem [shape: f32[48,16], index: 9, kind: input, shape index: {}]
  %s10 = inlined_call_operand.vmem [shape: f32[100,16], index: 10, kind: output, shape index: {}]
  %s11 = sld [smem:[#allocation0]]
  $region121: #{expert_gate_forward.1} parent=0
    _
  %s13 = ssub.s32 1, %s11
  %s14 = scalar_select 0, %s13, %s11
  $region1: #{expert_gate_forward.1} parent=0
    #allocation2 [shape = 'u8[57344]{0}', space=vmem, size = 0xe000, scoped, tag = 'output window, operand 0']
    loop: start=0, step=1, limit=4
    $region2: #{expert_gate_forward.1} parent=1 // loop_pre_header
      _
    $region3: #{expert_gate_forward.1} parent=1 // loop_header
      %s16 = sphi 0, %s20
      %p17 = scmp.ge.s32.totalorder %s16, 4
      %s26 = sphi 0, %s28
      %s29 = sphi 0, %s26
      %s30 = sphi 0, %s29
      %s46 = sphi 0, %s30
      %s50 = sphi 0, %s50
      %s52 = sphi 0, %s50
      %s53 = sphi 0, %s52
      %s67 = sphi 0, %s53
      %s71 = sphi 0, %s71
      %s73 = sphi 0, %s71
      %s74 = sphi 0, %s73
      %s88 = sphi 0, %s74
      %s92 = sphi 0, %s92
      %s94 = sphi 0, %s92
      %s95 = sphi 0, %s94
      %s109 = sphi 0, %s95
      %s113 = sphi 0, %s113
      %s115 = sphi 0, %s113
      %s116 = sphi 0, %s115
      %s130 = sphi 0, %s116
      %s134 = sphi 0, %s134
      %s136 = sphi 0, %s134
      %s137 = sphi 0, %s136
      %s151 = sphi 0, %s137
      %s155 = sphi 0, %s155
      %s157 = sphi 0, %s155
      %s158 = sphi 0, %s157
      %s172 = sphi 0, %s158
      %s176 = sphi 0, %s176
      %s178 = sphi 0, %s176
      %s179 = sphi 0, %s178
      %s193 = sphi 0, %s179
      %s197 = sphi 0, %s197
      %s199 = sphi 0, %s197
      %s200 = sphi 0, %s199
      %s214 = sphi 0, %s200
      %s218 = sphi 0, %s218
      %s220 = sphi 0, %s218
      %s221 = sphi 0, %s220
      %s235 = sphi 0, %s221
      %s241 = sphi 0, %s243
      %s244 = sphi 0, %s241
      %s245 = sphi 0, %s244
      %s261 = sphi 0, %s245
    $region4: #{expert_gate_forward.1} parent=1 // loop_header_branch
      %19 = sbr.rel (%p17) target = $region8
    $region5: #{expert_gate_forward.1} parent=1 // loop_body
      %s21 = ssub.s32 %s16, 1
      %s22 = ssub.s32 %s16, 2
      %s23 = sadd.s32 %s16, 1
      %s24 = ssub.s32 %s16, %s23
      %p25 = scmp.eq.s32.totalorder %s24, 0
      %s27 = sadd.s32 %s26, 1
      %s28 = scalar_select %p25, %s26, %s27
      %p31 = pneg %p25
      %p32 = scmp.eq.s32.totalorder %s16, 1
      %p33 = por %p31, %p32
      %p34 = scmp.ne.s32.totalorder %s26, %s29
      %p35 = scmp.eq.s32.totalorder %s16, 0
      %p36 = por %p34, %p35
      %p37 = scmp.ne.s32.totalorder %s26, %s29
      %p38 = scmp.eq.s32.totalorder %s21, 1
      %p39 = por %p37, %p38
      %p40 = scmp.ne.s32.totalorder %s29, %s30
      %p41 = scmp.eq.s32.totalorder %s21, 0
      %p42 = por %p40, %p41
      %p43 = scmp.ne.s32.totalorder %s29, %s30
      %p44 = scmp.eq.s32.totalorder %s22, 1
      %p45 = por %p43, %p44
      %p47 = scmp.ne.s32.totalorder %s30, %s46
      %p48 = scmp.eq.s32.totalorder %s22, 0
      %p49 = por %p47, %p48
      %s51 = sadd.s32 %s50, 1
      %p54 = scmp.eq.s32.totalorder %s16, 1
      %p55 = scmp.ne.s32.totalorder %s50, %s52
      %p56 = scmp.eq.s32.totalorder %s16, 0
      %p57 = por %p55, %p56
      %p58 = scmp.ne.s32.totalorder %s50, %s52
      %p59 = scmp.eq.s32.totalorder %s21, 1
      %p60 = por %p58, %p59
      %p61 = scmp.ne.s32.totalorder %s52, %s53
      %p62 = scmp.eq.s32.totalorder %s21, 0
      %p63 = por %p61, %p62
      %p64 = scmp.ne.s32.totalorder %s52, %s53
      %p65 = scmp.eq.s32.totalorder %s22, 1
      %p66 = por %p64, %p65
      %p68 = scmp.ne.s32.totalorder %s53, %s67
      %p69 = scmp.eq.s32.totalorder %s22, 0
      %p70 = por %p68, %p69
      %s72 = sadd.s32 %s71, 1
      %p75 = scmp.eq.s32.totalorder %s16, 1
      %p76 = scmp.ne.s32.totalorder %s71, %s73
      %p77 = scmp.eq.s32.totalorder %s16, 0
      %p78 = por %p76, %p77
      %p79 = scmp.ne.s32.totalorder %s71, %s73
      %p80 = scmp.eq.s32.totalorder %s21, 1
      %p81 = por %p79, %p80
      %p82 = scmp.ne.s32.totalorder %s73, %s74
      %p83 = scmp.eq.s32.totalorder %s21, 0
      %p84 = por %p82, %p83
      %p85 = scmp.ne.s32.totalorder %s73, %s74
      %p86 = scmp.eq.s32.totalorder %s22, 1
      %p87 = por %p85, %p86
      %p89 = scmp.ne.s32.totalorder %s74, %s88
      %p90 = scmp.eq.s32.totalorder %s22, 0
      %p91 = por %p89, %p90
      %s93 = sadd.s32 %s92, 1
      %p96 = scmp.eq.s32.totalorder %s16, 1
      %p97 = scmp.ne.s32.totalorder %s92, %s94
      %p98 = scmp.eq.s32.totalorder %s16, 0
      %p99 = por %p97, %p98
      %p100 = scmp.ne.s32.totalorder %s92, %s94
      %p101 = scmp.eq.s32.totalorder %s21, 1
      %p102 = por %p100, %p101
      %p103 = scmp.ne.s32.totalorder %s94, %s95
      %p104 = scmp.eq.s32.totalorder %s21, 0
      %p105 = por %p103, %p104
      %p106 = scmp.ne.s32.totalorder %s94, %s95
      %p107 = scmp.eq.s32.totalorder %s22, 1
      %p108 = por %p106, %p107
      %p110 = scmp.ne.s32.totalorder %s95, %s109
      %p111 = scmp.eq.s32.totalorder %s22, 0
      %p112 = por %p110, %p111
      %s114 = sadd.s32 %s113, 1
      %p117 = scmp.eq.s32.totalorder %s16, 1
      %p118 = scmp.ne.s32.totalorder %s113, %s115
      %p119 = scmp.eq.s32.totalorder %s16, 0
      %p120 = por %p118, %p119
      %p121 = scmp.ne.s32.totalorder %s113, %s115
      %p122 = scmp.eq.s32.totalorder %s21, 1
      %p123 = por %p121, %p122
      %p124 = scmp.ne.s32.totalorder %s115, %s116
      %p125 = scmp.eq.s32.totalorder %s21, 0
      %p126 = por %p124, %p125
      %p127 = scmp.ne.s32.totalorder %s115, %s116
      %p128 = scmp.eq.s32.totalorder %s22, 1
      %p129 = por %p127, %p128
      %p131 = scmp.ne.s32.totalorder %s116, %s130
      %p132 = scmp.eq.s32.totalorder %s22, 0
      %p133 = por %p131, %p132
      %s135 = sadd.s32 %s134, 1
      %p138 = scmp.eq.s32.totalorder %s16, 1
      %p139 = scmp.ne.s32.totalorder %s134, %s136
      %p140 = scmp.eq.s32.totalorder %s16, 0
      %p141 = por %p139, %p140
      %p142 = scmp.ne.s32.totalorder %s134, %s136
      %p143 = scmp.eq.s32.totalorder %s21, 1
      %p144 = por %p142, %p143
      %p145 = scmp.ne.s32.totalorder %s136, %s137
      %p146 = scmp.eq.s32.totalorder %s21, 0
      %p147 = por %p145, %p146
      %p148 = scmp.ne.s32.totalorder %s136, %s137
      %p149 = scmp.eq.s32.totalorder %s22, 1
      %p150 = por %p148, %p149
      %p152 = scmp.ne.s32.totalorder %s137, %s151
      %p153 = scmp.eq.s32.totalorder %s22, 0
      %p154 = por %p152, %p153
      %s156 = sadd.s32 %s155, 1
      %p159 = scmp.eq.s32.totalorder %s16, 1
      %p160 = scmp.ne.s32.totalorder %s155, %s157
      %p161 = scmp.eq.s32.totalorder %s16, 0
      %p162 = por %p160, %p161
      %p163 = scmp.ne.s32.totalorder %s155, %s157
      %p164 = scmp.eq.s32.totalorder %s21, 1
      %p165 = por %p163, %p164
      %p166 = scmp.ne.s32.totalorder %s157, %s158
      %p167 = scmp.eq.s32.totalorder %s21, 0
      %p168 = por %p166, %p167
      %p169 = scmp.ne.s32.totalorder %s157, %s158
      %p170 = scmp.eq.s32.totalorder %s22, 1
      %p171 = por %p169, %p170
      %p173 = scmp.ne.s32.totalorder %s158, %s172
      %p174 = scmp.eq.s32.totalorder %s22, 0
      %p175 = por %p173, %p174
      %s177 = sadd.s32 %s176, 1
      %p180 = scmp.eq.s32.totalorder %s16, 1
      %p181 = scmp.ne.s32.totalorder %s176, %s178
      %p182 = scmp.eq.s32.totalorder %s16, 0
      %p183 = por %p181, %p182
      %p184 = scmp.ne.s32.totalorder %s176, %s178
      %p185 = scmp.eq.s32.totalorder %s21, 1
      %p186 = por %p184, %p185
      %p187 = scmp.ne.s32.totalorder %s178, %s179
      %p188 = scmp.eq.s32.totalorder %s21, 0
      %p189 = por %p187, %p188
      %p190 = scmp.ne.s32.totalorder %s178, %s179
      %p191 = scmp.eq.s32.totalorder %s22, 1
      %p192 = por %p190, %p191
      %p194 = scmp.ne.s32.totalorder %s179, %s193
      %p195 = scmp.eq.s32.totalorder %s22, 0
      %p196 = por %p194, %p195
      %s198 = sadd.s32 %s197, 1
      %p201 = scmp.eq.s32.totalorder %s16, 1
      %p202 = scmp.ne.s32.totalorder %s197, %s199
      %p203 = scmp.eq.s32.totalorder %s16, 0
      %p204 = por %p202, %p203
      %p205 = scmp.ne.s32.totalorder %s197, %s199
      %p206 = scmp.eq.s32.totalorder %s21, 1
      %p207 = por %p205, %p206
      %p208 = scmp.ne.s32.totalorder %s199, %s200
      %p209 = scmp.eq.s32.totalorder %s21, 0
      %p210 = por %p208, %p209
      %p211 = scmp.ne.s32.totalorder %s199, %s200
      %p212 = scmp.eq.s32.totalorder %s22, 1
      %p213 = por %p211, %p212
      %p215 = scmp.ne.s32.totalorder %s200, %s214
      %p216 = scmp.eq.s32.totalorder %s22, 0
      %p217 = por %p215, %p216
      %s219 = sadd.s32 %s218, 1
      %p222 = scmp.eq.s32.totalorder %s16, 1
      %p223 = scmp.ne.s32.totalorder %s218, %s220
      %p224 = scmp.eq.s32.totalorder %s16, 0
      %p225 = por %p223, %p224
      %p226 = scmp.ne.s32.totalorder %s218, %s220
      %p227 = scmp.eq.s32.totalorder %s21, 1
      %p228 = por %p226, %p227
      %p229 = scmp.ne.s32.totalorder %s220, %s221
      %p230 = scmp.eq.s32.totalorder %s21, 0
      %p231 = por %p229, %p230
      %p232 = scmp.ne.s32.totalorder %s220, %s221
      %p233 = scmp.eq.s32.totalorder %s22, 1
      %p234 = por %p232, %p233
      %p236 = scmp.ne.s32.totalorder %s221, %s235
      %p237 = scmp.eq.s32.totalorder %s22, 0
      %p238 = por %p236, %p237
      %s239 = ssub.s32 %s16, %s23
      %p240 = scmp.eq.s32.totalorder %s239, 0
      %s242 = sadd.s32 %s241, 1
      %s243 = scalar_select %p240, %s241, %s242
      %p246 = pneg %p240
      %p247 = scmp.eq.s32.totalorder %s16, 1
      %p248 = por %p246, %p247
      %p249 = scmp.ne.s32.totalorder %s241, %s244
      %p250 = scmp.eq.s32.totalorder %s16, 0
      %p251 = por %p249, %p250
      %p252 = scmp.ne.s32.totalorder %s241, %s244
      %p253 = scmp.eq.s32.totalorder %s21, 1
      %p254 = por %p252, %p253
      %p255 = scmp.ne.s32.totalorder %s244, %s245
      %p256 = scmp.eq.s32.totalorder %s21, 0
      %p257 = por %p255, %p256
      %p258 = scmp.ne.s32.totalorder %s244, %s245
      %p259 = scmp.eq.s32.totalorder %s22, 1
      %p260 = por %p258, %p259
      %p262 = scmp.ne.s32.totalorder %s245, %s261
      %p263 = scmp.eq.s32.totalorder %s22, 0
      %p264 = por %p262, %p263
      %p265 = scmp.le.s32.totalorder 1, %s16
      %p266 = scmp.lt.s32.totalorder %s16, 3
      %p267 = pnand %p265, %p266
      %p268 = pneg %p267
      // Predicated region
      $region9: #{expert_gate_forward.1} parent=5 // pred_check
        _
      $region10: #{expert_gate_forward.1} parent=5 // pred_check_branch
        %270 = sbr.rel (%p267) target = $region12
      $region11: #{expert_gate_forward.1} parent=5 // pred_region
        %s271 = ssub.s32 %s16, 1
        // Predicated region
        $region13: #{expert_gate_forward.1} parent=11 // pred_check
          %p272 = pneg %p63
        $region14: #{expert_gate_forward.1} parent=11 // pred_check_branch
          %274 = sbr.rel (%p272) target = $region16
        $region15: #{expert_gate_forward.1} parent=11 // pred_region
          _
        $region16: #{expert_gate_forward.1} parent=11 // pred_fallthru
          _
        // Predicated region
        $region17: #{expert_gate_forward.1} parent=11 // pred_check
          %p275 = pneg %p84
        $region18: #{expert_gate_forward.1} parent=11 // pred_check_branch
          %277 = sbr.rel (%p275) target = $region20
        $region19: #{expert_gate_forward.1} parent=11 // pred_region
          _
        $region20: #{expert_gate_forward.1} parent=11 // pred_fallthru
          _
        // Predicated region
        $region21: #{expert_gate_forward.1} parent=11 // pred_check
          %p278 = pneg %p105
        $region22: #{expert_gate_forward.1} parent=11 // pred_check_branch
          %280 = sbr.rel (%p278) target = $region24
        $region23: #{expert_gate_forward.1} parent=11 // pred_region
          _
        $region24: #{expert_gate_forward.1} parent=11 // pred_fallthru
          _
        // Predicated region
        $region25: #{expert_gate_forward.1} parent=11 // pred_check
          %p281 = pneg %p126
        $region26: #{expert_gate_forward.1} parent=11 // pred_check_branch
          %283 = sbr.rel (%p281) target = $region28
        $region27: #{expert_gate_forward.1} parent=11 // pred_region
          _
        $region28: #{expert_gate_forward.1} parent=11 // pred_fallthru
          _
        // Predicated region
        $region29: #{expert_gate_forward.1} parent=11 // pred_check
          %p284 = pneg %p147
        $region30: #{expert_gate_forward.1} parent=11 // pred_check_branch
          %286 = sbr.rel (%p284) target = $region32
        $region31: #{expert_gate_forward.1} parent=11 // pred_region
          _
        $region32: #{expert_gate_forward.1} parent=11 // pred_fallthru
          _
        // Predicated region
        $region33: #{expert_gate_forward.1} parent=11 // pred_check
          %p287 = pneg %p168
        $region34: #{expert_gate_forward.1} parent=11 // pred_check_branch
          %289 = sbr.rel (%p287) target = $region36
        $region35: #{expert_gate_forward.1} parent=11 // pred_region
          _
        $region36: #{expert_gate_forward.1} parent=11 // pred_fallthru
          _
        // Predicated region
        $region37: #{expert_gate_forward.1} parent=11 // pred_check
          %p290 = pneg %p189
        $region38: #{expert_gate_forward.1} parent=11 // pred_check_branch
          %292 = sbr.rel (%p290) target = $region40
        $region39: #{expert_gate_forward.1} parent=11 // pred_region
          _
        $region40: #{expert_gate_forward.1} parent=11 // pred_fallthru
          _
        // Predicated region
        $region41: #{expert_gate_forward.1} parent=11 // pred_check
          %p293 = pneg %p210
        $region42: #{expert_gate_forward.1} parent=11 // pred_check_branch
          %295 = sbr.rel (%p293) target = $region44
        $region43: #{expert_gate_forward.1} parent=11 // pred_region
          _
        $region44: #{expert_gate_forward.1} parent=11 // pred_fallthru
          _
        // Predicated region
        $region45: #{expert_gate_forward.1} parent=11 // pred_check
          %p296 = pneg %p231
        $region46: #{expert_gate_forward.1} parent=11 // pred_check_branch
          %298 = sbr.rel (%p296) target = $region48
        $region47: #{expert_gate_forward.1} parent=11 // pred_region
          _
        $region48: #{expert_gate_forward.1} parent=11 // pred_fallthru
          _
      $region12: #{expert_gate_forward.1} parent=5 // pred_fallthru
        _
      %p299 = scmp.lt.s32.totalorder %s16, 2
      // Predicated region
      $region49: #{expert_gate_forward.1} parent=5 // pred_check
        %p300 = pneg %p299
      $region50: #{expert_gate_forward.1} parent=5 // pred_check_branch
        %302 = sbr.rel (%p300) target = $region52
      $region51: #{expert_gate_forward.1} parent=5 // pred_region
        // Predicated region
        $region53: #{expert_gate_forward.1} parent=51 // pred_check
          %p303 = pneg %p36
        $region54: #{expert_gate_forward.1} parent=51 // pred_check_branch
          %305 = sbr.rel (%p303) target = $region56
        $region55: #{expert_gate_forward.1} parent=51 // pred_region
          %s306 = smul.u32 7, %s16
          %s307 = ssub.s32 13, %s306
          %p308 = scmp.lt.s32.totalorder %s307, 7
          %s309 = scalar_select %p308, %s307, 7
          %s310 = smul.u32 8, %s309
          %p311 = scmp.lt.s32.totalorder %s306, 12
          %s312 = scalar_select %p311, %s306, 12
          %s313 = smul.addr %s312, 8
          %s314 = scalar_lea.vmem %s0, %s313
          %s315 = smul.u32 7, %s16
          %s316 = ssub.s32 13, %s315
          %p317 = scmp.lt.s32.totalorder %s316, 7
          %s318 = scalar_select %p317, %s316, 7
          %s319 = smul.u32 8, %s318
        $region56: #{expert_gate_forward.1} parent=51 // pred_fallthru
          _
      $region52: #{expert_gate_forward.1} parent=5 // pred_fallthru
        _
      %p320 = scmp.le.s32.totalorder 1, %s16
      %p321 = scmp.lt.s32.totalorder %s16, 3
      %p322 = pnand %p320, %p321
      %p323 = pneg %p322
      // Predicated region
      $region57: #{expert_gate_forward.1} parent=5 // pred_check
        _
      $region58: #{expert_gate_forward.1} parent=5 // pred_check_branch
        %325 = sbr.rel (%p322) target = $region60
      $region59: #{expert_gate_forward.1} parent=5 // pred_region
        %s326 = ssub.s32 %s16, 1
        %s327 = smul.u32 7, %s21
        %s328 = ssub.s32 13, %s327
        %p329 = scmp.lt.s32.totalorder %s328, 7
        %s330 = scalar_select %p329, %s328, 7
        %s331 = smul.u32 8, %s330
        %p332 = scmp.lt.s32.totalorder %s327, 12
        %s333 = scalar_select %p332, %s327, 12
        %s334 = smul.addr %s333, 8
        %s335 = scalar_lea.vmem %s0, %s334
        %p336 = pneg %p42
        %p337 = pneg %p39
        %p338 = pneg %p63
        %p339 = pneg %p60
        %p340 = pneg %p84
        %p341 = pneg %p81
        %p342 = pneg %p105
        %p343 = pneg %p102
        %p344 = pneg %p126
        %p345 = pneg %p123
        %p346 = pneg %p147
        %p347 = pneg %p144
        %p348 = pneg %p168
        %p349 = pneg %p165
        %p350 = pneg %p189
        %p351 = pneg %p186
        %p352 = pneg %p210
        %p353 = pneg %p207
        %p354 = pneg %p231
        %p355 = pneg %p228
        %p356 = pneg %p257
        %p357 = pneg %p254
        %s358 = sand.u32 %s244, 1
        %s359 = sand.u32 %s244, 1
        %s360 = smul.addr %s359, 56
        %s361 = scalar_lea.vmem [#allocation2], %s360
        %s362 = smul.u32 7, %s21
        %s363 = ssub.s32 13, %s362
        %p364 = scmp.lt.s32.totalorder %s363, 7
        %s365 = scalar_select %p364, %s363, 7
        %s366 = smul.u32 8, %s365
        %p367 = scmp.lt.s32.totalorder %s362, 12
        %s368 = scalar_select %p367, %s362, 12
        %s369 = smul.addr %s368, 8
        %s370 = scalar_lea.vmem %s0, %s369
        %s371 = smul.u32 7, %s21
        %s372 = ssub.s32 13, %s371
        %p373 = scmp.lt.s32.totalorder %s372, 7
        %s374 = scalar_select %p373, %s372, 7
        %s375 = smul.u32 8, %s374
        %s376 = smul.u32 7, %s21
        %s377 = ssub.s32 13, %s376
        %p378 = scmp.lt.s32.totalorder %s377, 7
        %s379 = scalar_select %p378, %s377, 7
        %s380 = smul.u32 8, %s379
        %v381 = vld [vmem:[%s370] sm:$0xff]
        %v382 = vld [vmem:[%s370 + $0x8] sm:$0xff]
        %v383 = vld [vmem:[%s370 + $0x10] sm:$0xff]
        %v384 = vld [vmem:[%s370 + $0x18] sm:$0xff]
        %v385 = vld [vmem:[%s370 + $0x20] sm:$0xff]
        %v386 = vld [vmem:[%s370 + $0x28] sm:$0xff]
        %v387 = vld [vmem:[%s370 + $0x30] sm:$0xff]
        %v388 = vld [vmem:[%s1] sm:$0xff]
        %v389 = vld [vmem:[%s1 + $0x8] sm:$0xff]
        %v390 = vld [vmem:[%s1 + $0x10] sm:$0xff]
        %v391 = vld [vmem:[%s1 + $0x18] sm:$0xff]
        %v392 = vld [vmem:[%s2] sm:$0x1]
        %v394 = vperm.slane %v392, 0
        %vm396 = vcmask 261120
        %v398 = vsel %vm396, %v381, 0
        %v401 = vsel %vm396, %v382, 0
        %v404 = vsel %vm396, %v383, 0
        %v407 = vsel %vm396, %v384, 0
        %v410 = vsel %vm396, %v385, 0
        %v413 = vsel %vm396, %v386, 0
        %v416 = vsel %vm396, %v387, 0
        %418 = vmatpush.msra.mxu0 0.0
        %419 = vmatpush.msra.mxu0 0.0
        %420 = vmatpush.msra.mxu0 0.0
        %421 = vmatpush.msra.mxu0 0.0
        %422 = vmatpush.msra.mxu0 0.0
        %423 = vmatpush.msra.mxu0 0.0
        %424 = vmatpush.msra.mxu0 0.0
        %425 = vmatpush.msra.mxu0 0.0
        %426 = vmatpush.msra.mxu0 0.0
        %427 = vmatpush.msra.mxu0 0.0
        %428 = vmatpush.msra.mxu0 0.0
        %429 = vmatpush.msra.mxu0 0.0
        %430 = vmatpush.msra.mxu0 %v391
        %431 = vmatpush.msra.mxu0 %v390
        %432 = vmatpush.msra.mxu0 %v389
        %433 = vmatpush.msra.mxu0 %v388
        %434 = vmatmul.f32.gmra.mxu0 %v398
        %v435 = vpop.f32.mrf.mxu0
        %v436 = vadd.f32 %v394, %v435
        %437 = vmatmul.f32.gmra.mxu0 %v401
        %v438 = vpop.f32.mrf.mxu0
        %v439 = vadd.f32 %v394, %v438
        %440 = vmatmul.f32.gmra.mxu0 %v404
        %v441 = vpop.f32.mrf.mxu0
        %v442 = vadd.f32 %v394, %v441
        %443 = vmatmul.f32.gmra.mxu0 %v407
        %v444 = vpop.f32.mrf.mxu0
        %v445 = vadd.f32 %v394, %v444
        %446 = vmatmul.f32.gmra.mxu0 %v410
        %v447 = vpop.f32.mrf.mxu0
        %v448 = vadd.f32 %v394, %v447
        %449 = vmatmul.f32.gmra.mxu0 %v413
        %v450 = vpop.f32.mrf.mxu0
        %v451 = vadd.f32 %v394, %v450
        %452 = vmatmul.f32.gmra.mxu0 %v416
        %v453 = vpop.f32.mrf.mxu0
        %v454 = vadd.f32 %v394, %v453
        %455 = vdwg.mxu0
        %v456 = vmax.f32 %v436, 0.0
        %v457 = vmax.f32 %v439, 0.0
        %v458 = vmax.f32 %v442, 0.0
        %v459 = vmax.f32 %v445, 0.0
        %v460 = vmax.f32 %v448, 0.0
        %v461 = vmax.f32 %v451, 0.0
        %v462 = vmax.f32 %v454, 0.0
        %v463 = vld [vmem:[%s3] sm:$0xff]
        %v464 = vld [vmem:[%s3 + $0x8] sm:$0xff]
        %v465 = vld [vmem:[%s3 + $0x10] sm:$0xff]
        %v466 = vld [vmem:[%s3 + $0x18] sm:$0xff]
        %v467 = vld [vmem:[%s3 + $0x20] sm:$0xff]
        %v468 = vld [vmem:[%s3 + $0x28] sm:$0xff]
        %v469 = vld [vmem:[%s4] sm:$0x1]
        %v471 = vperm.slane %v469, 0
        %vm473 = vcmask 392192
        %v475 = vsel %vm473, %v456, 0
        %v478 = vsel %vm473, %v457, 0
        %v481 = vsel %vm473, %v458, 0
        %v484 = vsel %vm473, %v459, 0
        %v487 = vsel %vm473, %v460, 0
        %v490 = vsel %vm473, %v461, 0
        %v493 = vsel %vm473, %v462, 0
        %495 = vmatpush.msra.mxu0 0.0
        %496 = vmatpush.msra.mxu0 0.0
        %497 = vmatpush.msra.mxu0 0.0
        %498 = vmatpush.msra.mxu0 0.0
        %499 = vmatpush.msra.mxu0 0.0
        %500 = vmatpush.msra.mxu0 0.0
        %501 = vmatpush.msra.mxu0 0.0
        %502 = vmatpush.msra.mxu0 0.0
        %503 = vmatpush.msra.mxu0 0.0
        %504 = vmatpush.msra.mxu0 0.0
        %505 = vmatpush.msra.mxu0 %v468
        %506 = vmatpush.msra.mxu0 %v467
        %507 = vmatpush.msra.mxu0 %v466
        %508 = vmatpush.msra.mxu0 %v465
        %509 = vmatpush.msra.mxu0 %v464
        %510 = vmatpush.msra.mxu0 %v463
        %511 = vmatmul.f32.gmra.mxu0 %v475
        %v512 = vpop.f32.mrf.mxu0
        %v513 = vadd.f32 %v471, %v512
        %514 = vmatmul.f32.gmra.mxu0 %v478
        %v515 = vpop.f32.mrf.mxu0
        %v516 = vadd.f32 %v471, %v515
        %517 = vmatmul.f32.gmra.mxu0 %v481
        %v518 = vpop.f32.mrf.mxu0
        %v519 = vadd.f32 %v471, %v518
        %520 = vmatmul.f32.gmra.mxu0 %v484
        %v521 = vpop.f32.mrf.mxu0
        %v522 = vadd.f32 %v471, %v521
        %523 = vmatmul.f32.gmra.mxu0 %v487
        %v524 = vpop.f32.mrf.mxu0
        %v525 = vadd.f32 %v471, %v524
        %526 = vmatmul.f32.gmra.mxu0 %v490
        %v527 = vpop.f32.mrf.mxu0
        %v528 = vadd.f32 %v471, %v527
        %529 = vmatmul.f32.gmra.mxu0 %v493
        %v530 = vpop.f32.mrf.mxu0
        %v531 = vadd.f32 %v471, %v530
        %532 = vdwg.mxu0
        %v533 = vmax.f32 %v513, 0.0
        %v534 = vmax.f32 %v516, 0.0
        %v535 = vmax.f32 %v519, 0.0
        %v536 = vmax.f32 %v522, 0.0
        %v537 = vmax.f32 %v525, 0.0
        %v538 = vmax.f32 %v528, 0.0
        %v539 = vmax.f32 %v531, 0.0
        %v540 = vld [vmem:[%s5] sm:$0xff]
        %v541 = vld [vmem:[%s5 + $0x8] sm:$0xff]
        %v542 = vld [vmem:[%s5 + $0x10] sm:$0xff]
        %v543 = vld [vmem:[%s6] sm:$0x1]
        %v545 = vperm.slane %v543, 0
        %vm547 = vcmask 195584
        %v549 = vsel %vm547, %v533, 0
        %v552 = vsel %vm547, %v534, 0
        %v555 = vsel %vm547, %v535, 0
        %v558 = vsel %vm547, %v536, 0
        %v561 = vsel %vm547, %v537, 0
        %v564 = vsel %vm547, %v538, 0
        %v567 = vsel %vm547, %v539, 0
        %569 = vmatpush.msra.mxu0 0.0
        %570 = vmatpush.msra.mxu0 0.0
        %571 = vmatpush.msra.mxu0 0.0
        %572 = vmatpush.msra.mxu0 0.0
        %573 = vmatpush.msra.mxu0 0.0
        %574 = vmatpush.msra.mxu0 0.0
        %575 = vmatpush.msra.mxu0 0.0
        %576 = vmatpush.msra.mxu0 0.0
        %577 = vmatpush.msra.mxu0 0.0
        %578 = vmatpush.msra.mxu0 0.0
        %579 = vmatpush.msra.mxu0 0.0
        %580 = vmatpush.msra.mxu0 0.0
        %581 = vmatpush.msra.mxu0 0.0
        %582 = vmatpush.msra.mxu0 %v542
        %583 = vmatpush.msra.mxu0 %v541
        %584 = vmatpush.msra.mxu0 %v540
        %585 = vmatmul.f32.gmra.mxu0 %v549
        %v586 = vpop.f32.mrf.mxu0
        %v587 = vadd.f32 %v545, %v586
        %588 = vmatmul.f32.gmra.mxu0 %v552
        %v589 = vpop.f32.mrf.mxu0
        %v590 = vadd.f32 %v545, %v589
        %591 = vmatmul.f32.gmra.mxu0 %v555
        %v592 = vpop.f32.mrf.mxu0
        %v593 = vadd.f32 %v545, %v592
        %594 = vmatmul.f32.gmra.mxu0 %v558
        %v595 = vpop.f32.mrf.mxu0
        %v596 = vadd.f32 %v545, %v595
        %597 = vmatmul.f32.gmra.mxu0 %v561
        %v598 = vpop.f32.mrf.mxu0
        %v599 = vadd.f32 %v545, %v598
        %600 = vmatmul.f32.gmra.mxu0 %v564
        %v601 = vpop.f32.mrf.mxu0
        %v602 = vadd.f32 %v545, %v601
        %603 = vmatmul.f32.gmra.mxu0 %v567
        %v604 = vpop.f32.mrf.mxu0
        %v605 = vadd.f32 %v545, %v604
        %606 = vdwg.mxu0
        %v607 = vmax.f32 %v587, 0.0
        %v608 = vmax.f32 %v590, 0.0
        %v609 = vmax.f32 %v593, 0.0
        %v610 = vmax.f32 %v596, 0.0
        %v611 = vmax.f32 %v599, 0.0
        %v612 = vmax.f32 %v602, 0.0
        %v613 = vmax.f32 %v605, 0.0
        %vm614 = vcmask 441728
        %v615 = vsel %vm614, %v436, -inf
        %616 = vmax.xlane.f32.xlu0 %v615
        %v617 = vpop.xlane.xlu0 %616
        %v618 = vsel %vm614, %v439, -inf
        %619 = vmax.xlane.f32.xlu0 %v618
        %v620 = vpop.xlane.xlu0 %619
        %v621 = vsel %vm614, %v442, -inf
        %622 = vmax.xlane.f32.xlu0 %v621
        %v623 = vpop.xlane.xlu0 %622
        %v624 = vsel %vm614, %v445, -inf
        %625 = vmax.xlane.f32.xlu0 %v624
        %v626 = vpop.xlane.xlu0 %625
        %v627 = vsel %vm614, %v448, -inf
        %628 = vmax.xlane.f32.xlu0 %v627
        %v629 = vpop.xlane.xlu0 %628
        %v630 = vsel %vm614, %v451, -inf
        %631 = vmax.xlane.f32.xlu0 %v630
        %v632 = vpop.xlane.xlu0 %631
        %v633 = vsel %vm614, %v454, -inf
        %634 = vmax.xlane.f32.xlu0 %v633
        %v635 = vpop.xlane.xlu0 %634
        %v636 = vsub.f32 %v436, %v617
        %v637 = vsub.f32 %v439, %v620
        %v638 = vsub.f32 %v442, %v623
        %v639 = vsub.f32 %v445, %v626
        %v640 = vsub.f32 %v448, %v629
        %v641 = vsub.f32 %v451, %v632
        %v642 = vsub.f32 %v454, %v635
        %v643 = vmul.f32 %v636, 1.442695
        %v644 = vpow.pop %v643
        %v645 = vmul.f32 %v637, 1.442695
        %v646 = vpow.pop %v645
        %v647 = vmul.f32 %v638, 1.442695
        %v648 = vpow.pop %v647
        %v649 = vmul.f32 %v639, 1.442695
        %v650 = vpow.pop %v649
        %v651 = vmul.f32 %v640, 1.442695
        %v652 = vpow.pop %v651
        %v653 = vmul.f32 %v641, 1.442695
        %v654 = vpow.pop %v653
        %v655 = vmul.f32 %v642, 1.442695
        %v656 = vpow.pop %v655
        %v657 = vld [vmem:[%s7] sm:$0x3f]
        %665 = vrot.lane.b32.xlu0 %v644, 80
        %v666 = vpop.permute.xlu0 %665
        %667 = vrot.lane.b32.xlu0 %v646, 80
        %v668 = vpop.permute.xlu0 %667
        %669 = vrot.lane.b32.xlu0 %v648, 80
        %v670 = vpop.permute.xlu0 %669
        %671 = vrot.lane.b32.xlu0 %v650, 80
        %v672 = vpop.permute.xlu0 %671
        %673 = vrot.lane.b32.xlu0 %v652, 80
        %v674 = vpop.permute.xlu0 %673
        %675 = vrot.lane.b32.xlu0 %v654, 80
        %v676 = vpop.permute.xlu0 %675
        %677 = vrot.lane.b32.xlu0 %v656, 80
        %v678 = vpop.permute.xlu0 %677
        %vm679 = vcmask 48128
        %v680 = vsel %vm679, %v666, 0
        %v682 = vsel %vm679, %v668, 0
        %v684 = vsel %vm679, %v670, 0
        %v686 = vsel %vm679, %v672, 0
        %v688 = vsel %vm679, %v674, 0
        %v690 = vsel %vm679, %v676, 0
        %v692 = vsel %vm679, %v678, 0
        %vm694 = vcmask 1045504
        %v696 = vsel %vm694, %v657, 0
        %698 = vmatpush.msra.mxu0 0.0
        %699 = vmatpush.msra.mxu0 0.0
        %700 = vmatpush.msra.mxu0 0.0
        %701 = vmatpush.msra.mxu0 0.0
        %702 = vmatpush.msra.mxu0 0.0
        %703 = vmatpush.msra.mxu0 0.0
        %704 = vmatpush.msra.mxu0 0.0
        %705 = vmatpush.msra.mxu0 0.0
        %706 = vmatpush.msra.mxu0 0.0
        %707 = vmatpush.msra.mxu0 0.0
        %708 = vmatpush.msra.mxu0 0.0
        %709 = vmatpush.msra.mxu0 0.0
        %710 = vmatpush.msra.mxu0 0.0
        %711 = vmatpush.msra.mxu0 0.0
        %712 = vmatpush.msra.mxu0 0.0
        %713 = vmatpush.msra.mxu0 %v696
        %714 = vmatmul.f32.gmra.mxu0 %v680
        %v715 = vpop.f32.mrf.mxu0
        %v716 = vadd.f32 0.0, %v715
        %717 = vmatmul.f32.gmra.mxu0 %v682
        %v718 = vpop.f32.mrf.mxu0
        %v719 = vadd.f32 0.0, %v718
        %720 = vmatmul.f32.gmra.mxu0 %v684
        %v721 = vpop.f32.mrf.mxu0
        %v722 = vadd.f32 0.0, %v721
        %723 = vmatmul.f32.gmra.mxu0 %v686
        %v724 = vpop.f32.mrf.mxu0
        %v725 = vadd.f32 0.0, %v724
        %726 = vmatmul.f32.gmra.mxu0 %v688
        %v727 = vpop.f32.mrf.mxu0
        %v728 = vadd.f32 0.0, %v727
        %729 = vmatmul.f32.gmra.mxu0 %v690
        %v730 = vpop.f32.mrf.mxu0
        %v731 = vadd.f32 0.0, %v730
        %732 = vmatmul.f32.gmra.mxu0 %v692
        %v733 = vpop.f32.mrf.mxu0
        %v734 = vadd.f32 0.0, %v733
        %735 = vdwg.mxu0
        %v736 = vrcp.pop %v716
        %v737 = vrcp.pop %v719
        %v738 = vrcp.pop %v722
        %v739 = vrcp.pop %v725
        %v740 = vrcp.pop %v728
        %v741 = vrcp.pop %v731
        %v742 = vrcp.pop %v734
        %750 = vrot.lane.b32.xlu0 %v736, 48
        %v751 = vpop.permute.xlu0 %750
        %752 = vrot.lane.b32.xlu0 %v737, 48
        %v753 = vpop.permute.xlu0 %752
        %754 = vrot.lane.b32.xlu0 %v738, 48
        %v755 = vpop.permute.xlu0 %754
        %756 = vrot.lane.b32.xlu0 %v739, 48
        %v757 = vpop.permute.xlu0 %756
        %758 = vrot.lane.b32.xlu0 %v740, 48
        %v759 = vpop.permute.xlu0 %758
        %760 = vrot.lane.b32.xlu0 %v741, 48
        %v761 = vpop.permute.xlu0 %760
        %762 = vrot.lane.b32.xlu0 %v742, 48
        %v763 = vpop.permute.xlu0 %762
        %v771 = vmul.f32 %v644, %v751
        %v772 = vmul.f32 %v646, %v753
        %v773 = vmul.f32 %v648, %v755
        %v774 = vmul.f32 %v650, %v757
        %v775 = vmul.f32 %v652, %v759
        %v776 = vmul.f32 %v654, %v761
        %v777 = vmul.f32 %v656, %v763
        %v778 = vld [vmem:[%s8] sm:$0x3f]
        %786 = vrot.lane.b32.xlu0 %v771, 80
        %v787 = vpop.permute.xlu0 %786
        %788 = vrot.lane.b32.xlu0 %v772, 80
        %v789 = vpop.permute.xlu0 %788
        %790 = vrot.lane.b32.xlu0 %v773, 80
        %v791 = vpop.permute.xlu0 %790
        %792 = vrot.lane.b32.xlu0 %v774, 80
        %v793 = vpop.permute.xlu0 %792
        %794 = vrot.lane.b32.xlu0 %v775, 80
        %v795 = vpop.permute.xlu0 %794
        %796 = vrot.lane.b32.xlu0 %v776, 80
        %v797 = vpop.permute.xlu0 %796
        %798 = vrot.lane.b32.xlu0 %v777, 80
        %v799 = vpop.permute.xlu0 %798
        %v800 = vsel %vm679, %v787, 0
        %v802 = vsel %vm679, %v789, 0
        %v804 = vsel %vm679, %v791, 0
        %v806 = vsel %vm679, %v793, 0
        %v808 = vsel %vm679, %v795, 0
        %v810 = vsel %vm679, %v797, 0
        %v812 = vsel %vm679, %v799, 0
        %v815 = vsel %vm694, %v778, 0
        %817 = vmatpush.msra.mxu0 0.0
        %818 = vmatpush.msra.mxu0 0.0
        %819 = vmatpush.msra.mxu0 0.0
        %820 = vmatpush.msra.mxu0 0.0
        %821 = vmatpush.msra.mxu0 0.0
        %822 = vmatpush.msra.mxu0 0.0
        %823 = vmatpush.msra.mxu0 0.0
        %824 = vmatpush.msra.mxu0 0.0
        %825 = vmatpush.msra.mxu0 0.0
        %826 = vmatpush.msra.mxu0 0.0
        %827 = vmatpush.msra.mxu0 0.0
        %828 = vmatpush.msra.mxu0 0.0
        %829 = vmatpush.msra.mxu0 0.0
        %830 = vmatpush.msra.mxu0 0.0
        %831 = vmatpush.msra.mxu0 0.0
        %832 = vmatpush.msra.mxu0 %v815
        %833 = vmatmul.f32.gmra.mxu0 %v800
        %v834 = vpop.f32.mrf.mxu0
        %v835 = vadd.f32 0.0, %v834
        %836 = vmatmul.f32.gmra.mxu0 %v802
        %v837 = vpop.f32.mrf.mxu0
        %v838 = vadd.f32 0.0, %v837
        %839 = vmatmul.f32.gmra.mxu0 %v804
        %v840 = vpop.f32.mrf.mxu0
        %v841 = vadd.f32 0.0, %v840
        %842 = vmatmul.f32.gmra.mxu0 %v806
        %v843 = vpop.f32.mrf.mxu0
        %v844 = vadd.f32 0.0, %v843
        %845 = vmatmul.f32.gmra.mxu0 %v808
        %v846 = vpop.f32.mrf.mxu0
        %v847 = vadd.f32 0.0, %v846
        %848 = vmatmul.f32.gmra.mxu0 %v810
        %v849 = vpop.f32.mrf.mxu0
        %v850 = vadd.f32 0.0, %v849
        %851 = vmatmul.f32.gmra.mxu0 %v812
        %v852 = vpop.f32.mrf.mxu0
        %v853 = vadd.f32 0.0, %v852
        %854 = vdwg.mxu0
        %862 = vrot.lane.b32.xlu0 %v607, 24
        %v863 = vpop.permute.xlu0 %862
        %864 = vrot.lane.b32.xlu0 %v608, 24
        %v865 = vpop.permute.xlu0 %864
        %866 = vrot.lane.b32.xlu0 %v609, 24
        %v867 = vpop.permute.xlu0 %866
        %868 = vrot.lane.b32.xlu0 %v610, 24
        %v869 = vpop.permute.xlu0 %868
        %870 = vrot.lane.b32.xlu0 %v611, 24
        %v871 = vpop.permute.xlu0 %870
        %872 = vrot.lane.b32.xlu0 %v612, 24
        %v873 = vpop.permute.xlu0 %872
        %874 = vrot.lane.b32.xlu0 %v613, 24
        %v875 = vpop.permute.xlu0 %874
        %v883 = vsel %vm547, %v607, %v863
        %v884 = vsel %vm547, %v608, %v865
        %v885 = vsel %vm547, %v609, %v867
        %v886 = vsel %vm547, %v610, %v869
        %v887 = vsel %vm547, %v611, %v871
        %v888 = vsel %vm547, %v612, %v873
        %v889 = vsel %vm547, %v613, %v875
        %v890 = vmul.f32 %v835, %v883
        %v891 = vmul.f32 %v838, %v884
        %v892 = vmul.f32 %v841, %v885
        %v893 = vmul.f32 %v844, %v886
        %v894 = vmul.f32 %v847, %v887
        %v895 = vmul.f32 %v850, %v888
        %v896 = vmul.f32 %v853, %v889
        %v897 = vld [vmem:[%s9] sm:$0xff]
        %v898 = vld [vmem:[%s9 + $0x8] sm:$0xff]
        %v899 = vld [vmem:[%s9 + $0x10] sm:$0xff]
        %v900 = vld [vmem:[%s9 + $0x18] sm:$0xff]
        %v901 = vld [vmem:[%s9 + $0x20] sm:$0xff]
        %v902 = vld [vmem:[%s9 + $0x28] sm:$0xff]
        %v904 = vsel %vm473, %v890, 0
        %v907 = vsel %vm473, %v891, 0
        %v910 = vsel %vm473, %v892, 0
        %v913 = vsel %vm473, %v893, 0
        %v916 = vsel %vm473, %v894, 0
        %v919 = vsel %vm473, %v895, 0
        %v922 = vsel %vm473, %v896, 0
        %924 = vmatpush.msra.mxu0 0.0
        %925 = vmatpush.msra.mxu0 0.0
        %926 = vmatpush.msra.mxu0 0.0
        %927 = vmatpush.msra.mxu0 0.0
        %928 = vmatpush.msra.mxu0 0.0
        %929 = vmatpush.msra.mxu0 0.0
        %930 = vmatpush.msra.mxu0 0.0
        %931 = vmatpush.msra.mxu0 0.0
        %932 = vmatpush.msra.mxu0 0.0
        %933 = vmatpush.msra.mxu0 0.0
        %934 = vmatpush.msra.mxu0 %v902
        %935 = vmatpush.msra.mxu0 %v901
        %936 = vmatpush.msra.mxu0 %v900
        %937 = vmatpush.msra.mxu0 %v899
        %938 = vmatpush.msra.mxu0 %v898
        %939 = vmatpush.msra.mxu0 %v897
        %940 = vmatmul.f32.gmra.mxu0 %v904
        %v941 = vpop.f32.mrf.mxu0
        %v942 = vadd.f32 0.0, %v941
        %943 = vmatmul.f32.gmra.mxu0 %v907
        %v944 = vpop.f32.mrf.mxu0
        %v945 = vadd.f32 0.0, %v944
        %946 = vmatmul.f32.gmra.mxu0 %v910
        %v947 = vpop.f32.mrf.mxu0
        %v948 = vadd.f32 0.0, %v947
        %949 = vmatmul.f32.gmra.mxu0 %v913
        %v950 = vpop.f32.mrf.mxu0
        %v951 = vadd.f32 0.0, %v950
        %952 = vmatmul.f32.gmra.mxu0 %v916
        %v953 = vpop.f32.mrf.mxu0
        %v954 = vadd.f32 0.0, %v953
        %955 = vmatmul.f32.gmra.mxu0 %v919
        %v956 = vpop.f32.mrf.mxu0
        %v957 = vadd.f32 0.0, %v956
        %958 = vmatmul.f32.gmra.mxu0 %v922
        %v959 = vpop.f32.mrf.mxu0
        %v960 = vadd.f32 0.0, %v959
        %961 = vdwg.mxu0
        %vm962 = vcmask 130048
        %963 = vst.msk [vmem:[%s361] sm:$0xff] %vm962, %v942
        %964 = vst.msk [vmem:[%s361 + $0x8] sm:$0xff] %vm962, %v945
        %965 = vst.msk [vmem:[%s361 + $0x10] sm:$0xff] %vm962, %v948
        %966 = vst.msk [vmem:[%s361 + $0x18] sm:$0xff] %vm962, %v951
        %967 = vst.msk [vmem:[%s361 + $0x20] sm:$0xff] %vm962, %v954
        %968 = vst.msk [vmem:[%s361 + $0x28] sm:$0xff] %vm962, %v957
        %969 = vst.msk [vmem:[%s361 + $0x30] sm:$0xff] %vm962, %v960
        %s970 = sand.u32 %s244, 1
        %s971 = sand.u32 %s244, 1
        %s972 = smul.addr %s971, 56
        %s973 = scalar_lea.vmem [#allocation2], %s972
        // Predicated region
        $region61: #{expert_gate_forward.1} parent=59 // pred_check
          %p974 = pneg %p254
        $region62: #{expert_gate_forward.1} parent=59 // pred_check_branch
          %976 = sbr.rel (%p974) target = $region64
        $region63: #{expert_gate_forward.1} parent=59 // pred_region
          %s977 = smul.u32 7, %s21
          %s978 = ssub.s32 13, %s977
          %p979 = scmp.lt.s32.totalorder %s978, 7
          %s980 = scalar_select %p979, %s978, 7
          %s981 = smul.u32 8, %s980
          %p982 = scmp.ne.s32.totalorder 0, %s981
          %s983 = smul.addr %s977, 8
          %s984 = scalar_lea.vmem %s10, %s983
          // Predicated region
          $region65: #{expert_gate_forward.1} parent=63 // pred_check
            %p985 = pneg %p982
          $region66: #{expert_gate_forward.1} parent=63 // pred_check_branch
            %987 = sbr.rel (%p985) target = $region68
          $region67: #{expert_gate_forward.1} parent=63 // pred_region
            // Predicated region
            $region69: #{expert_gate_forward.1} parent=67 // pred_check
              _
            $region70: #{expert_gate_forward.1} parent=67 // pred_check_branch
              %989 = sbr.rel (0) target = $region72
            $region71: #{expert_gate_forward.1} parent=67 // pred_region
              // Predicated region
              $region91: #{expert_gate_forward.1} parent=71 // pred_check
                _
              $region92: #{expert_gate_forward.1} parent=71 // pred_check_branch
                %1052 = sbr.rel (0) target = $region94
              $region93: #{expert_gate_forward.1} parent=71 // pred_region
                %s1053 = sdiv.u32.pop %s980, 7
                %s1054 = srem.u32.pop %s980, 7
                // While loop
                $region95: #{expert_gate_forward.1} parent=93 // loop_pre_header
                  _
                $region96: #{expert_gate_forward.1} parent=93 // loop_header
                  %s1056 = sphi 0, %s1058
                  %p1057 = scmp.ge.s32.totalorder %s1056, %s1053
                  %s1061 = sphi 0, %s1080
                  %s1062 = sphi %s973, %s1083
                  %s1063 = sphi %s984, %s1084
                $region97: #{expert_gate_forward.1} parent=93 // loop_header_branch
                  %1060 = sbr.rel (%p1057) target = $region101
                $region98: #{expert_gate_forward.1} parent=93 // loop_body
                  %v1064 = vld [vmem:[%s1062] sm:$0xff]
                  %1065 = vst [vmem:[%s1063] sm:$0xff] %v1064
                  %v1066 = vld [vmem:[%s1062 + $0x8] sm:$0xff]
                  %1067 = vst [vmem:[%s1063 + $0x8] sm:$0xff] %v1066
                  %v1068 = vld [vmem:[%s1062 + $0x10] sm:$0xff]
                  %1069 = vst [vmem:[%s1063 + $0x10] sm:$0xff] %v1068
                  %v1070 = vld [vmem:[%s1062 + $0x18] sm:$0xff]
                  %1071 = vst [vmem:[%s1063 + $0x18] sm:$0xff] %v1070
                  %v1072 = vld [vmem:[%s1062 + $0x20] sm:$0xff]
                  %1073 = vst [vmem:[%s1063 + $0x20] sm:$0xff] %v1072
                  %v1074 = vld [vmem:[%s1062 + $0x28] sm:$0xff]
                  %1075 = vst [vmem:[%s1063 + $0x28] sm:$0xff] %v1074
                  %v1076 = vld [vmem:[%s1062 + $0x30] sm:$0xff]
                  %1077 = vst [vmem:[%s1063 + $0x30] sm:$0xff] %v1076
                  %s1078 = sadd.s32 1, %s1061
                  %p1079 = scmp.ge.s32.totalorder %s1078, %s1053
                  %s1080 = scalar_select %p1079, 0, %s1078
                  %s1081 = smul.u32 %s1080, 56
                  %s1082 = smul.u32 %s1080, 56
                  %s1083 = scalar_lea.vmem %s973, %s1081 [#allocation2]
                  %s1084 = scalar_lea.vmem %s984, %s1082
                $region99: #{expert_gate_forward.1} parent=93 // loop_footer
                  %s1058 = sadd.s32 %s1056, 1
                $region100: #{expert_gate_forward.1} parent=93 // loop_footer_branch
                  %1055 = sbr.rel target = $region96
                $region101: #{expert_gate_forward.1} parent=93 // loop_exit
                  _
                %s1085 = sdiv.u32.pop %s980, 7
                %s1086 = srem.u32.pop %s980, 7
                %s1087 = smul.u32 %s1085, 7
                %s1088 = smul.u32 8, %s1087
                %s1089 = scalar_lea.vmem %s973, %s1088 [#allocation2]
                %s1090 = smul.u32 8, %s1087
                %s1091 = scalar_lea.vmem %s984, %s1090
                // While loop
                $region102: #{expert_gate_forward.1} parent=93 // loop_pre_header
                  _
                $region103: #{expert_gate_forward.1} parent=93 // loop_header
                  %s1093 = sphi 0, %s1095
                  %p1094 = scmp.ge.s32.totalorder %s1093, %s1086
                  %s1098 = sphi 0, %s1105
                  %s1099 = sphi %s1089, %s1108
                  %s1100 = sphi %s1091, %s1109
                $region104: #{expert_gate_forward.1} parent=93 // loop_header_branch
                  %1097 = sbr.rel (%p1094) target = $region108
                $region105: #{expert_gate_forward.1} parent=93 // loop_body
                  %v1101 = vld [vmem:[%s1099] sm:$0xff]
                  %1102 = vst [vmem:[%s1100] sm:$0xff] %v1101
                  %s1103 = sadd.s32 1, %s1098
                  %p1104 = scmp.ge.s32.totalorder %s1103, %s1086
                  %s1105 = scalar_select %p1104, 0, %s1103
                  %s1106 = smul.u32 %s1105, 8
                  %s1107 = smul.u32 %s1105, 8
                  %s1108 = scalar_lea.vmem %s1089, %s1106 [#allocation2]
                  %s1109 = scalar_lea.vmem %s1091, %s1107
                $region106: #{expert_gate_forward.1} parent=93 // loop_footer
                  %s1095 = sadd.s32 %s1093, 1
                $region107: #{expert_gate_forward.1} parent=93 // loop_footer_branch
                  %1092 = sbr.rel target = $region103
                $region108: #{expert_gate_forward.1} parent=93 // loop_exit
                  _
              $region94: #{expert_gate_forward.1} parent=71 // pred_fallthru
                _
              // Predicated region
              $region109: #{expert_gate_forward.1} parent=71 // pred_check
                _
              $region110: #{expert_gate_forward.1} parent=71 // pred_check_branch
                %1111 = sbr.rel target = $region112
              $region111: #{expert_gate_forward.1} parent=71 // pred_region
                _
              $region112: #{expert_gate_forward.1} parent=71 // pred_fallthru
                _
            $region72: #{expert_gate_forward.1} parent=67 // pred_fallthru
              _
            // Predicated region
            $region73: #{expert_gate_forward.1} parent=67 // pred_check
              _
            $region74: #{expert_gate_forward.1} parent=67 // pred_check_branch
              %991 = sbr.rel target = $region76
            $region75: #{expert_gate_forward.1} parent=67 // pred_region
              %s993 = ssub.s32 256, 1
              %s994 = sdiv.u32.pop %s980, 7
              %s995 = srem.u32.pop %s980, 7
              // While loop
              $region77: #{expert_gate_forward.1} parent=75 // loop_pre_header
                _
              $region78: #{expert_gate_forward.1} parent=75 // loop_header
                %s997 = sphi 0, %s999
                %p998 = scmp.ge.s32.totalorder %s997, %s994
                %s1002 = sphi 0, %s1021
                %s1003 = sphi %s973, %s1024
                %s1004 = sphi %s984, %s1025
              $region79: #{expert_gate_forward.1} parent=75 // loop_header_branch
                %1001 = sbr.rel (%p998) target = $region83
              $region80: #{expert_gate_forward.1} parent=75 // loop_body
                %v1005 = vld [vmem:[%s1003] sm:%s993]
                %1006 = vst [vmem:[%s1004] sm:%s993] %v1005
                %v1007 = vld [vmem:[%s1003 + $0x8] sm:%s993]
                %1008 = vst [vmem:[%s1004 + $0x8] sm:%s993] %v1007
                %v1009 = vld [vmem:[%s1003 + $0x10] sm:%s993]
                %1010 = vst [vmem:[%s1004 + $0x10] sm:%s993] %v1009
                %v1011 = vld [vmem:[%s1003 + $0x18] sm:%s993]
                %1012 = vst [vmem:[%s1004 + $0x18] sm:%s993] %v1011
                %v1013 = vld [vmem:[%s1003 + $0x20] sm:%s993]
                %1014 = vst [vmem:[%s1004 + $0x20] sm:%s993] %v1013
                %v1015 = vld [vmem:[%s1003 + $0x28] sm:%s993]
                %1016 = vst [vmem:[%s1004 + $0x28] sm:%s993] %v1015
                %v1017 = vld [vmem:[%s1003 + $0x30] sm:%s993]
                %1018 = vst [vmem:[%s1004 + $0x30] sm:%s993] %v1017
                %s1019 = sadd.s32 1, %s1002
                %p1020 = scmp.ge.s32.totalorder %s1019, %s994
                %s1021 = scalar_select %p1020, 0, %s1019
                %s1022 = smul.u32 %s1021, 56
                %s1023 = smul.u32 %s1021, 56
                %s1024 = scalar_lea.vmem %s973, %s1022 [#allocation2]
                %s1025 = scalar_lea.vmem %s984, %s1023
              $region81: #{expert_gate_forward.1} parent=75 // loop_footer
                %s999 = sadd.s32 %s997, 1
              $region82: #{expert_gate_forward.1} parent=75 // loop_footer_branch
                %996 = sbr.rel target = $region78
              $region83: #{expert_gate_forward.1} parent=75 // loop_exit
                _
              %s1026 = sdiv.u32.pop %s980, 7
              %s1027 = srem.u32.pop %s980, 7
              %s1028 = smul.u32 %s1026, 7
              %s1029 = smul.u32 8, %s1028
              %s1030 = scalar_lea.vmem %s973, %s1029 [#allocation2]
              %s1031 = smul.u32 8, %s1028
              %s1032 = scalar_lea.vmem %s984, %s1031
              // While loop
              $region84: #{expert_gate_forward.1} parent=75 // loop_pre_header
                _
              $region85: #{expert_gate_forward.1} parent=75 // loop_header
                %s1034 = sphi 0, %s1036
                %p1035 = scmp.ge.s32.totalorder %s1034, %s1027
                %s1039 = sphi 0, %s1046
                %s1040 = sphi %s1030, %s1049
                %s1041 = sphi %s1032, %s1050
              $region86: #{expert_gate_forward.1} parent=75 // loop_header_branch
                %1038 = sbr.rel (%p1035) target = $region90
              $region87: #{expert_gate_forward.1} parent=75 // loop_body
                %v1042 = vld [vmem:[%s1040] sm:%s993]
                %1043 = vst [vmem:[%s1041] sm:%s993] %v1042
                %s1044 = sadd.s32 1, %s1039
                %p1045 = scmp.ge.s32.totalorder %s1044, %s1027
                %s1046 = scalar_select %p1045, 0, %s1044
                %s1047 = smul.u32 %s1046, 8
                %s1048 = smul.u32 %s1046, 8
                %s1049 = scalar_lea.vmem %s1030, %s1047 [#allocation2]
                %s1050 = scalar_lea.vmem %s1032, %s1048
              $region88: #{expert_gate_forward.1} parent=75 // loop_footer
                %s1036 = sadd.s32 %s1034, 1
              $region89: #{expert_gate_forward.1} parent=75 // loop_footer_branch
                %1033 = sbr.rel target = $region85
              $region90: #{expert_gate_forward.1} parent=75 // loop_exit
                _
            $region76: #{expert_gate_forward.1} parent=67 // pred_fallthru
              _
          $region68: #{expert_gate_forward.1} parent=63 // pred_fallthru
            _
          %1112 = vnop
        $region64: #{expert_gate_forward.1} parent=59 // pred_fallthru
          _
      $region60: #{expert_gate_forward.1} parent=5 // pred_fallthru
        _
      %p1113 = scmp.le.s32.totalorder 2, %s16
      // Predicated region
      $region113: #{expert_gate_forward.1} parent=5 // pred_check
        %p1114 = pneg %p1113
      $region114: #{expert_gate_forward.1} parent=5 // pred_check_branch
        %1116 = sbr.rel (%p1114) target = $region116
      $region115: #{expert_gate_forward.1} parent=5 // pred_region
        %s1117 = ssub.s32 %s16, 2
        // Predicated region
        $region117: #{expert_gate_forward.1} parent=115 // pred_check
          %p1118 = pneg %p260
        $region118: #{expert_gate_forward.1} parent=115 // pred_check_branch
          %1120 = sbr.rel (%p1118) target = $region120
        $region119: #{expert_gate_forward.1} parent=115 // pred_region
          %s1121 = sand.u32 %s245, 1
          %s1122 = sand.u32 %s245, 1
          %s1123 = smul.addr %s1122, 56
          %s1124 = scalar_lea.vmem [#allocation2], %s1123
        $region120: #{expert_gate_forward.1} parent=115 // pred_fallthru
          _
      $region116: #{expert_gate_forward.1} parent=5 // pred_fallthru
        _
    $region6: #{expert_gate_forward.1} parent=1 // loop_footer
      %s20 = sadd.s32 1, %s16
    $region7: #{expert_gate_forward.1} parent=1 // loop_footer_branch
      %15 = sbr.rel target = $region3
    $region8: #{expert_gate_forward.1} parent=1 // loop_exit
      _

</llo_original>
